<compile_context>
chip_gen: v6e
topology: v6e:2x2x1
jax: 0.10.0
libtpu: 0.0.40
codegen_flags: <defaults>
</compile_context>

<pallas_src>
import functools

import jax
import jax.numpy as jnp
from jax import lax
from jax.experimental import pallas as pl
from jax.experimental.pallas import tpu as pltpu


def wscl_kernel(feat_rows_ref, feat_cols_ref, aux_c_ref, aux_r_ref, out_ref,
                m_ref, l_ref, acc_ref, *,
                p, tempS, thresholdS, tempW, n_valid):
    k_idx = pl.program_id(1)
    n_k = pl.num_programs(1)

    # ---- init running stats at the first key block --------------------------
    @pl.when(k_idx == 0)
    def _():
        m_ref[...] = jnp.full(m_ref.shape, -jnp.inf, dtype=jnp.float32)
        l_ref[...] = jnp.zeros(l_ref.shape, dtype=jnp.float32)
        acc_ref[...] = jnp.zeros(acc_ref.shape, dtype=jnp.float32)

    feat_rows = feat_rows_ref[...]          # (tm, D)  bf16/f32 (query rows)
    feat_cols = feat_cols_ref[...]          # (D, tn)  bf16/f32 (key columns, pre-transposed)
    aux_c = aux_c_ref[...]                  # (tm, 2)  f32 [label, gender] columns
    aux_r = aux_r_ref[...]                  # (2, tn)  f32 [label, gender] rows

    label_c = aux_c[:, 0:1]                 # (tm, 1)
    gender_c = aux_c[:, 1:2]                # (tm, 1)
    label_r = aux_r[0:1, :]                 # (1, tn)
    gender_r = aux_r[1:2, :]                # (1, tn)

    # ---- count_score_in (this column block) ---------------------------------
    tempS_male = jnp.float32(tempS)
    tempS_female = jnp.float32(tempS / 2.0)
    tempS_gender = gender_c * tempS_male + (1.0 - gender_c) * tempS_female   # (tm,1)
    inv_tempS = pl.reciprocal(tempS_gender, approx=False)                    # (tm,1)

    p_f = float(p)
    if p_f == 2.0:
        # Fold the temperature once on the (tm,1) column; drop abs (square kills sign).
        inv_tempS2 = inv_tempS * inv_tempS
        diff = label_c - label_r                                             # (tm,tn)
        xp = (diff * diff) * inv_tempS2
    else:
        distance = jnp.abs(label_c - label_r)
        x = distance * inv_tempS
        if p_f == int(p_f) and p_f > 0:
            xp = lax.integer_pow(x, int(p_f))
        else:
            xp = jnp.power(x, jnp.float32(p_f))
    score_raw = jnp.exp(-xp)                                                 # (tm,tn)
    keep = (score_raw >= jnp.float32(thresholdS)) & (gender_c == gender_r)
    score = jnp.where(keep, score_raw, jnp.float32(0.0))

    # ---- count_distance_in (MXU Gram block) + online softmax accumulation ----
    gram = jnp.dot(feat_rows, feat_cols, preferred_element_type=jnp.float32)  # (tm,tn)
    g = gram * jnp.float32(1.0 / tempW)

    # Mask padded key columns to -inf: excluded from the max, zeroed by exp().
    tn = g.shape[1]
    col_ids = k_idx * tn + lax.broadcasted_iota(jnp.int32, (1, tn), 1)       # (1,tn)
    valid = col_ids < n_valid
    gm = jnp.where(valid, g, jnp.float32(-jnp.inf))

    m_old = m_ref[...]                                                       # (tm,1)
    m_new = jnp.maximum(m_old, jnp.max(gm, axis=-1, keepdims=True))          # (tm,1)
    alpha = jnp.exp(m_old - m_new)                                           # (tm,1); 0 at k==0
    dot_blk = jnp.exp(gm - m_new)                                            # (tm,tn); 0 at padded cols

    l_ref[...] = alpha * l_ref[...] + jnp.sum(dot_blk, axis=-1, keepdims=True)
    acc_ref[...] = alpha * acc_ref[...] + jnp.sum(score * dot_blk, axis=-1, keepdims=True)
    m_ref[...] = m_new

    # ---- finalize: weight_dot -> -log, lane-dense store ----------------------
    @pl.when(k_idx == n_k - 1)
    def _():
        inv_sum = pl.reciprocal(l_ref[...], approx=False)                    # (tm,1)
        weight_dot = acc_ref[...] * inv_sum                                  # (tm,1)
        neg_log = -jnp.log(jnp.maximum(weight_dot, jnp.float32(1e-10)))
        # Replicate across 128 lanes: full-width unmasked stores instead of
        # lane-width-1 masked stores.  The wrapper reads column 0.
        out_ref[...] = jnp.broadcast_to(neg_log, out_ref.shape)


def _round_up(x, m):
    return (x + m - 1) // m * m


def wscl_loss(minibatch_features, label, gender, *, p, tempS, thresholdS, tempW,
              block_rows=256, block_cols=512, use_bf16_matmul=True):
    """Wrapper mirroring WSCL.forward(minibatch_features, label, gender)."""
    feats = jnp.asarray(minibatch_features, jnp.float32)
    N, D = feats.shape
    label_f = jnp.asarray(label, jnp.float32).reshape(N)
    gender_f = jnp.asarray(gender, jnp.float32).reshape(N)

    # ---- row (query) tiling: keep >= 2 row blocks when N > 128 so the
    # "parallel" grid axis can be sharded across both v7x TensorCores.
    n_pad8 = _round_up(N, 8)
    if n_pad8 <= 128:
        tm = n_pad8
    else:
        tm = min(block_rows, _round_up((n_pad8 + 1) // 2, 8))
    n_rows = _round_up(N, tm)

    # ---- key (column) tiling: lane dim must be a multiple of 128.
    tn = min(block_cols, _round_up(N, 128))
    n_cols = _round_up(N, tn)

    mm_dtype = jnp.bfloat16 if use_bf16_matmul else jnp.float32

    # Pre-transpose the RHS once HBM-side -> MXU-native (tm,D)x(D,tn) in-kernel.
    feat_rows = jnp.pad(feats, ((0, n_rows - N), (0, 0))).astype(mm_dtype)    # (n_rows, D)
    feat_cols = jnp.pad(feats, ((0, n_cols - N), (0, 0))).T.astype(mm_dtype)  # (D, n_cols)

    aux_c = jnp.pad(jnp.stack([label_f, gender_f], axis=1),
                    ((0, n_rows - N), (0, 0)))                                # (n_rows, 2)
    aux_r = jnp.pad(jnp.stack([label_f, gender_f], axis=0),
                    ((0, 0), (0, n_cols - N)))                                # (2, n_cols)

    kernel = functools.partial(
        wscl_kernel, p=p, tempS=tempS, thresholdS=thresholdS, tempW=tempW,
        n_valid=N)

    out = pl.pallas_call(
        kernel,
        out_shape=jax.ShapeDtypeStruct((n_rows, 128), jnp.float32),
        grid_spec=pltpu.PrefetchScalarGridSpec(
            num_scalar_prefetch=0,
            grid=(n_rows // tm, n_cols // tn),     # (rows parallel, keys = reduction, last)
            in_specs=[
                pl.BlockSpec((tm, D), lambda i, k: (i, 0)),    # query row tile
                pl.BlockSpec((D, tn), lambda i, k: (0, k)),    # key column tile (pre-transposed)
                pl.BlockSpec((tm, 2), lambda i, k: (i, 0)),    # [label, gender] for rows
                pl.BlockSpec((2, tn), lambda i, k: (0, k)),    # [label, gender] for keys
            ],
            out_specs=pl.BlockSpec((tm, 128), lambda i, k: (i, 0)),
            scratch_shapes=[pltpu.VMEM((tm, 1), jnp.float32),   # running row max
                            pltpu.VMEM((tm, 1), jnp.float32),   # running dot_sum
                            pltpu.VMEM((tm, 1), jnp.float32)],  # running sum(score*dot)
        ),
        compiler_params=pltpu.CompilerParams(
            dimension_semantics=("parallel", "arbitrary"),
            # Usage is O(tm*tn + tn*D) and well under this; <= ~48 MiB also
            # leaves headroom on v7x's 64 MiB physical VMEM.
            vmem_limit_bytes=48 * 1024 * 1024,
        ),
    )(feat_rows, feat_cols, aux_c, aux_r)

    # Column 0 holds the per-row -log(weight_dot); padded rows are dropped.
    return jnp.sum(out[:N, 0])


def _reference_loss(feats, label, gender, *, p, tempS, thresholdS, tempW):
    """Plain-JAX f32 reference of the PyTorch forward."""
    feats = feats.astype(jnp.float32)
    label = jnp.asarray(label, jnp.float32).reshape(-1)
    gender = jnp.asarray(gender, jnp.float32).reshape(-1)
    tempS_g = gender * tempS + (1.0 - gender) * (tempS / 2.0)
    dist = jnp.abs(label[:, None] - label[None, :])
    score = jnp.exp(-((dist / tempS_g[:, None]) ** p))
    score = score * (score >= thresholdS)
    gmask = (gender[:, None] == gender[None, :]).astype(jnp.float32)
    score = score * gmask
    dot = jnp.exp(feats @ feats.T / tempW)
    dot_matrix = jnp.maximum(dot / dot.sum(-1, keepdims=True), 1e-10)
    w = jnp.sum(score * dot_matrix, axis=-1)
    return jnp.sum(-jnp.log(jnp.maximum(w, 1e-10)))


if __name__ == "__main__":
    # Hyperparameters of the WSCL module.
    p = 2.0
    tempS = 4.0
    thresholdS = 0.1
    tempW = 0.5

    # Small, deterministic inputs: batch N=8, feature dim D=32.
    key = jax.random.PRNGKey(0)
    k_feat, k_label, k_gender = jax.random.split(key, 3)
    N, D = 8, 32
    feats = 0.25 * jax.random.normal(k_feat, (N, D), dtype=jnp.float32)
    label = jax.random.uniform(k_label, (N,), dtype=jnp.float32) * 10.0
    gender = jax.random.bernoulli(k_gender, 0.5, (N,)).astype(jnp.float32)

    ref = _reference_loss(feats, label, gender,
                          p=p, tempS=tempS, thresholdS=thresholdS, tempW=tempW)

    # f32-exact path: must match the reference tightly.
    loss_f32 = wscl_loss(feats, label, gender, p=p, tempS=tempS,
                         thresholdS=thresholdS, tempW=tempW,
                         use_bf16_matmul=False)
    loss_f32 = jax.block_until_ready(loss_f32)
    assert jnp.allclose(loss_f32, ref, rtol=1e-4, atol=1e-4), (loss_f32, ref)

    # Default fast path: bf16 MXU operands (f32 accumulation); looser tolerance.
    loss_bf16 = wscl_loss(feats, label, gender, p=p, tempS=tempS,
                          thresholdS=thresholdS, tempW=tempW,
                          use_bf16_matmul=True)
    loss_bf16 = jax.block_until_ready(loss_bf16)
    assert jnp.allclose(loss_bf16, ref, rtol=2e-2, atol=2e-2), (loss_bf16, ref)

    print("KERNEL_OK")
</pallas_src>

<mosaic_0001>
module attributes {stable_mosaic.version = 11 : i64} {
  func.func @wscl_kernel(%arg0: i32, %arg1: i32, %arg2: memref<8x32xf32, #tpu.memory_space<vmem>>, %arg3: memref<32x128xf32, #tpu.memory_space<vmem>>, %arg4: memref<8x2xf32, #tpu.memory_space<vmem>>, %arg5: memref<2x128xf32, #tpu.memory_space<vmem>>, %arg6: memref<8x128xf32, #tpu.memory_space<vmem>>, %arg7: memref<8x1xf32, #tpu.memory_space<vmem>>, %arg8: memref<8x1xf32, #tpu.memory_space<vmem>>, %arg9: memref<8x1xf32, #tpu.memory_space<vmem>>) attributes {dimension_semantics = [#tpu.dimension_semantics<parallel>, #tpu.dimension_semantics<arbitrary>], iteration_bounds = array<i64: 1, 1>, scalar_prefetch = 0 : i64, scratch_operands = 3 : i64, tpu.core_type = #tpu.core_type<tc>, window_params = [{transform_indices = @transform_0, window_bounds = array<i64: 8, 32>}, {transform_indices = @transform_1, window_bounds = array<i64: 32, 128>}, {transform_indices = @transform_2, window_bounds = array<i64: 8, 2>}, {transform_indices = @transform_3, window_bounds = array<i64: 2, 128>}, {transform_indices = @transform_4, window_bounds = array<i64: 8, 128>}]} {
    %c0_i32 = arith.constant 0 : i32
    %0 = arith.cmpi eq, %arg1, %c0_i32 : i32
    %1 = arith.extui %0 : i1 to i32
    %c0_i32_0 = arith.constant 0 : i32
    %2 = arith.cmpi ne, %1, %c0_i32_0 : i32
    scf.if %2 {
      %cst_33 = arith.constant 0xFF800000 : f32
      %76 = vector.broadcast %cst_33 : f32 to vector<8x1xf32>
      %c0_34 = arith.constant 0 : index
      %c0_35 = arith.constant 0 : index
      %77 = vector.load %arg7[%c0_34, %c0_35] : memref<8x1xf32, #tpu.memory_space<vmem>>, vector<8x1xf32>
      tpu.vector_store %arg7[%c0_34, %c0_35], %76 {strides = array<i32>} : memref<8x1xf32, #tpu.memory_space<vmem>>, vector<8x1xf32>,
      %cst_36 = arith.constant 0.000000e+00 : f32
      %78 = vector.broadcast %cst_36 : f32 to vector<8x1xf32>
      %c0_37 = arith.constant 0 : index
      %c0_38 = arith.constant 0 : index
      %79 = vector.load %arg8[%c0_37, %c0_38] : memref<8x1xf32, #tpu.memory_space<vmem>>, vector<8x1xf32>
      tpu.vector_store %arg8[%c0_37, %c0_38], %78 {strides = array<i32>} : memref<8x1xf32, #tpu.memory_space<vmem>>, vector<8x1xf32>,
      %cst_39 = arith.constant 0.000000e+00 : f32
      %80 = vector.broadcast %cst_39 : f32 to vector<8x1xf32>
      %c0_40 = arith.constant 0 : index
      %c0_41 = arith.constant 0 : index
      %81 = vector.load %arg9[%c0_40, %c0_41] : memref<8x1xf32, #tpu.memory_space<vmem>>, vector<8x1xf32>
      tpu.vector_store %arg9[%c0_40, %c0_41], %80 {strides = array<i32>} : memref<8x1xf32, #tpu.memory_space<vmem>>, vector<8x1xf32>,
    } else {
    }
    %c0 = arith.constant 0 : index
    %c0_1 = arith.constant 0 : index
    %3 = vector.load %arg2[%c0, %c0_1] : memref<8x32xf32, #tpu.memory_space<vmem>>, vector<8x32xf32>
    %c0_2 = arith.constant 0 : index
    %c0_3 = arith.constant 0 : index
    %4 = vector.load %arg3[%c0_2, %c0_3] : memref<32x128xf32, #tpu.memory_space<vmem>>, vector<32x128xf32>
    %c0_4 = arith.constant 0 : index
    %c0_5 = arith.constant 0 : index
    %5 = vector.load %arg4[%c0_4, %c0_5] : memref<8x2xf32, #tpu.memory_space<vmem>>, vector<8x2xf32>
    %c0_6 = arith.constant 0 : index
    %c0_7 = arith.constant 0 : index
    %6 = vector.load %arg5[%c0_6, %c0_7] : memref<2x128xf32, #tpu.memory_space<vmem>>, vector<2x128xf32>
    %7 = vector.extract_strided_slice %5 {offsets = [0, 0], sizes = [8, 1], strides = [1, 1]} : vector<8x2xf32> to vector<8x1xf32>
    %8 = vector.extract_strided_slice %5 {offsets = [0, 1], sizes = [8, 1], strides = [1, 1]} : vector<8x2xf32> to vector<8x1xf32>
    %9 = vector.extract_strided_slice %6 {offsets = [0, 0], sizes = [1, 128], strides = [1, 1]} : vector<2x128xf32> to vector<1x128xf32>
    %10 = vector.extract_strided_slice %6 {offsets = [1, 0], sizes = [1, 128], strides = [1, 1]} : vector<2x128xf32> to vector<1x128xf32>
    %cst = arith.constant 4.000000e+00 : f32
    %11 = vector.broadcast %cst : f32 to vector<8x1xf32>
    %12 = arith.mulf %8, %11 : vector<8x1xf32>
    %cst_8 = arith.constant 1.000000e+00 : f32
    %13 = vector.broadcast %cst_8 : f32 to vector<8x1xf32>
    %14 = arith.subf %13, %8 : vector<8x1xf32>
    %cst_9 = arith.constant 2.000000e+00 : f32
    %15 = vector.broadcast %cst_9 : f32 to vector<8x1xf32>
    %16 = arith.mulf %14, %15 : vector<8x1xf32>
    %17 = arith.addf %12, %16 : vector<8x1xf32>
    %18 = tpu.reciprocal %17 : vector<8x1xf32> -> vector<8x1xf32>
    %19 = arith.mulf %18, %18 : vector<8x1xf32>
    %20 = vector.broadcast %7 : vector<8x1xf32> to vector<8x128xf32>
    %21 = vector.broadcast %9 : vector<1x128xf32> to vector<8x128xf32>
    %22 = arith.subf %20, %21 : vector<8x128xf32>
    %23 = arith.mulf %22, %22 : vector<8x128xf32>
    %24 = vector.broadcast %19 : vector<8x1xf32> to vector<8x128xf32>
    %25 = arith.mulf %23, %24 : vector<8x128xf32>
    %cst_10 = arith.constant 0.000000e+00 : f32
    %26 = vector.broadcast %cst_10 : f32 to vector<8x128xf32>
    %27 = arith.subf %26, %25 : vector<8x128xf32>
    %28 = math.exp %27 : vector<8x128xf32>
    %cst_11 = arith.constant 1.000000e-01 : f32
    %29 = vector.broadcast %cst_11 : f32 to vector<8x128xf32>
    %30 = arith.cmpf oge, %28, %29 : vector<8x128xf32>
    %31 = vector.broadcast %8 : vector<8x1xf32> to vector<8x128xf32>
    %32 = vector.broadcast %10 : vector<1x128xf32> to vector<8x128xf32>
    %33 = arith.cmpf oeq, %31, %32 : vector<8x128xf32>
    %34 = arith.andi %30, %33 : vector<8x128xi1>
    %cst_12 = arith.constant 0.000000e+00 : f32
    %35 = vector.broadcast %cst_12 : f32 to vector<8x128xf32>
    %36 = arith.select %34, %28, %35 : vector<8x128xi1>, vector<8x128xf32>
    %cst_13 = arith.constant dense<0.000000e+00> : vector<8x128xf32>
    %37 = tpu.matmul %3, %4, %cst_13 {dimension_numbers = #tpu.dot_dimension_numbers<[1], [0], [0], [1], [0, 0, 1, 1], [], []>} : vector<8x32xf32>, vector<32x128xf32>, vector<8x128xf32> -> vector<8x128xf32>
    %cst_14 = arith.constant 2.000000e+00 : f32
    %38 = vector.broadcast %cst_14 : f32 to vector<8x128xf32>
    %39 = arith.mulf %37, %38 : vector<8x128xf32>
    %c128_i32 = arith.constant 128 : i32
    %40 = arith.muli %arg1, %c128_i32 : i32
    %41 = tpu.iota {dimensions = array<i32: 1>} : vector<1x128xi32>
    %42 = vector.broadcast %40 : i32 to vector<1x128xi32>
    %43 = arith.addi %42, %41 : vector<1x128xi32>
    %c8_i32 = arith.constant 8 : i32
    %44 = vector.broadcast %c8_i32 : i32 to vector<1x128xi32>
    %45 = arith.cmpi slt, %43, %44 : vector<1x128xi32>
    %cst_15 = arith.constant 0xFF800000 : f32
    %46 = vector.shape_cast %45 : vector<1x128xi1> to vector<1x128xi1>
    %47 = vector.broadcast %46 : vector<1x128xi1> to vector<8x128xi1>
    %48 = vector.broadcast %cst_15 : f32 to vector<8x128xf32>
    %49 = arith.select %47, %39, %48 : vector<8x128xi1>, vector<8x128xf32>
    %c0_16 = arith.constant 0 : index
    %c0_17 = arith.constant 0 : index
    %50 = vector.load %arg7[%c0_16, %c0_17] : memref<8x1xf32, #tpu.memory_space<vmem>>, vector<8x1xf32>
    %cst_18 = arith.constant dense<0xFF800000> : vector<8xf32>
    %51 = vector.multi_reduction <maximumf>, %49, %cst_18 [1] : vector<8x128xf32> to vector<8xf32>
    %52 = vector.shape_cast %51 : vector<8xf32> to vector<8x1xf32>
    %53 = arith.maximumf %50, %52 : vector<8x1xf32>
    %54 = arith.subf %50, %53 : vector<8x1xf32>
    %55 = math.exp %54 : vector<8x1xf32>
    %56 = vector.broadcast %53 : vector<8x1xf32> to vector<8x128xf32>
    %57 = arith.subf %49, %56 : vector<8x128xf32>
    %58 = math.exp %57 : vector<8x128xf32>
    %c0_19 = arith.constant 0 : index
    %c0_20 = arith.constant 0 : index
    %59 = vector.load %arg8[%c0_19, %c0_20] : memref<8x1xf32, #tpu.memory_space<vmem>>, vector<8x1xf32>
    %60 = arith.mulf %55, %59 : vector<8x1xf32>
    %cst_21 = arith.constant dense<0.000000e+00> : vector<8xf32>
    %61 = vector.multi_reduction <add>, %58, %cst_21 [1] : vector<8x128xf32> to vector<8xf32>
    %62 = vector.shape_cast %61 : vector<8xf32> to vector<8x1xf32>
    %63 = arith.addf %60, %62 : vector<8x1xf32>
    %c0_22 = arith.constant 0 : index
    %c0_23 = arith.constant 0 : index
    %64 = vector.load %arg8[%c0_22, %c0_23] : memref<8x1xf32, #tpu.memory_space<vmem>>, vector<8x1xf32>
    tpu.vector_store %arg8[%c0_22, %c0_23], %63 {strides = array<i32>} : memref<8x1xf32, #tpu.memory_space<vmem>>, vector<8x1xf32>,
    %c0_24 = arith.constant 0 : index
    %c0_25 = arith.constant 0 : index
    %65 = vector.load %arg9[%c0_24, %c0_25] : memref<8x1xf32, #tpu.memory_space<vmem>>, vector<8x1xf32>
    %66 = arith.mulf %55, %65 : vector<8x1xf32>
    %67 = arith.mulf %36, %58 : vector<8x128xf32>
    %cst_26 = arith.constant dense<0.000000e+00> : vector<8xf32>
    %68 = vector.multi_reduction <add>, %67, %cst_26 [1] : vector<8x128xf32> to vector<8xf32>
    %69 = vector.shape_cast %68 : vector<8xf32> to vector<8x1xf32>
    %70 = arith.addf %66, %69 : vector<8x1xf32>
    %c0_27 = arith.constant 0 : index
    %c0_28 = arith.constant 0 : index
    %71 = vector.load %arg9[%c0_27, %c0_28] : memref<8x1xf32, #tpu.memory_space<vmem>>, vector<8x1xf32>
    tpu.vector_store %arg9[%c0_27, %c0_28], %70 {strides = array<i32>} : memref<8x1xf32, #tpu.memory_space<vmem>>, vector<8x1xf32>,
    %c0_29 = arith.constant 0 : index
    %c0_30 = arith.constant 0 : index
    %72 = vector.load %arg7[%c0_29, %c0_30] : memref<8x1xf32, #tpu.memory_space<vmem>>, vector<8x1xf32>
    tpu.vector_store %arg7[%c0_29, %c0_30], %53 {strides = array<i32>} : memref<8x1xf32, #tpu.memory_space<vmem>>, vector<8x1xf32>,
    %c0_i32_31 = arith.constant 0 : i32
    %73 = arith.cmpi eq, %arg1, %c0_i32_31 : i32
    %74 = arith.extui %73 : i1 to i32
    %c0_i32_32 = arith.constant 0 : i32
    %75 = arith.cmpi ne, %74, %c0_i32_32 : i32
    scf.if %75 {
      %c0_33 = arith.constant 0 : index
      %c0_34 = arith.constant 0 : index
      %76 = vector.load %arg8[%c0_33, %c0_34] : memref<8x1xf32, #tpu.memory_space<vmem>>, vector<8x1xf32>
      %77 = tpu.reciprocal %76 : vector<8x1xf32> -> vector<8x1xf32>
      %c0_35 = arith.constant 0 : index
      %c0_36 = arith.constant 0 : index
      %78 = vector.load %arg9[%c0_35, %c0_36] : memref<8x1xf32, #tpu.memory_space<vmem>>, vector<8x1xf32>
      %79 = arith.mulf %78, %77 : vector<8x1xf32>
      %cst_37 = arith.constant 1.000000e-10 : f32
      %80 = vector.broadcast %cst_37 : f32 to vector<8x1xf32>
      %81 = arith.maximumf %79, %80 : vector<8x1xf32>
      %82 = math.log %81 : vector<8x1xf32>
      %cst_38 = arith.constant 0.000000e+00 : f32
      %83 = vector.broadcast %cst_38 : f32 to vector<8x1xf32>
      %84 = arith.subf %83, %82 : vector<8x1xf32>
      %85 = vector.shape_cast %84 : vector<8x1xf32> to vector<8x1xf32>
      %86 = vector.broadcast %85 : vector<8x1xf32> to vector<8x128xf32>
      %c0_39 = arith.constant 0 : index
      %c0_40 = arith.constant 0 : index
      %87 = vector.load %arg6[%c0_39, %c0_40] : memref<8x128xf32, #tpu.memory_space<vmem>>, vector<8x128xf32>
      tpu.vector_store %arg6[%c0_39, %c0_40], %86 {strides = array<i32>} : memref<8x128xf32, #tpu.memory_space<vmem>>, vector<8x128xf32>,
    } else {
    }
    return
  }
  func.func @transform_0(%arg0: i32, %arg1: i32) -> (i32, i32) {
    %c0_i32 = arith.constant 0 : i32
    %c0_i32_0 = arith.constant 0 : i32
    return %arg0, %c0_i32 : i32, i32
  }
  func.func @transform_1(%arg0: i32, %arg1: i32) -> (i32, i32) {
    %c0_i32 = arith.constant 0 : i32
    %c0_i32_0 = arith.constant 0 : i32
    return %c0_i32, %arg1 : i32, i32
  }
  func.func @transform_2(%arg0: i32, %arg1: i32) -> (i32, i32) {
    %c0_i32 = arith.constant 0 : i32
    %c0_i32_0 = arith.constant 0 : i32
    return %arg0, %c0_i32 : i32, i32
  }
  func.func @transform_3(%arg0: i32, %arg1: i32) -> (i32, i32) {
    %c0_i32 = arith.constant 0 : i32
    %c0_i32_0 = arith.constant 0 : i32
    return %c0_i32, %arg1 : i32, i32
  }
  func.func @transform_4(%arg0: i32, %arg1: i32) -> (i32, i32) {
    %c0_i32 = arith.constant 0 : i32
    %c0_i32_0 = arith.constant 0 : i32
    return %arg0, %c0_i32 : i32, i32
  }
}

</mosaic_0001>

<llo_original>
// kernel: tpu_custom_call.1
$region0: #{tpu_custom_call.1}
  #allocation0 [shape = 'u32[]', space=smem, size = 0x4, offset = 0x4, fixed_abs, tag = 'smem constant byte address 0x4 - core index']
  #allocation1 [shape = 'u32[144,128]{1,0:T(1,128)}', space=vmem, size = 0x12000, scoped, tag = 'internal scratch']
  #allocation2 [shape = 'f32[8,1]{1,0:T(8,128)}', space=vmem, size = 0x1000, scoped, tag = 'scratch operand']
  #allocation3 [shape = 'f32[8,1]{1,0:T(8,128)}', space=vmem, size = 0x1000, scoped, tag = 'scratch operand']
  #allocation4 [shape = 'f32[8,1]{1,0:T(8,128)}', space=vmem, size = 0x1000, scoped, tag = 'scratch operand']
  %s0 = inlined_call_operand.vmem [shape: f32[8,32], index: 0, kind: input, shape index: {}]
  %s1 = inlined_call_operand.hbm [shape: f32[32,128], index: 1, kind: input, shape index: {}]
  %s2 = inlined_call_operand.vmem [shape: f32[8,2], index: 2, kind: input, shape index: {}]
  %s3 = inlined_call_operand.vmem [shape: f32[2,128], index: 3, kind: input, shape index: {}]
  %s4 = inlined_call_operand.hbm [shape: f32[8,128], index: 4, kind: output, shape index: {}]
  %s5 = sld [smem:[#allocation0]]
  $region38: #{tpu_custom_call.1} parent=0
    _
  %s7 = ssub.s32 1, %s5
  %s8 = scalar_select 0, %s7, %s5
  $region1: #{tpu_custom_call.1} parent=0
    #allocation5 [shape = 'u8[16384]{0}', space=vmem, size = 0x4000, scoped, tag = 'input window, operand 1, single buffered']
    #allocation6 [shape = 's32[1]{0}', space=sflag, size = 0x4, scoped, tag = 'scoped memory for tpu_custom_call.1']
    #allocation7 [shape = 's32[1]{0}', space=sflag, size = 0x4, scoped, tag = 'scoped memory for tpu_custom_call.1']
    #allocation8 [shape = 'u8[4096]{0}', space=vmem, size = 0x1000, scoped, tag = 'output window, operand 0, single buffered']
    %9 = vsyncpa [#allocation6], 0
    %10 = vsyncpa [#allocation7], 0
    // Predicated region
    $region2: #{tpu_custom_call.1} parent=1 // pred_check
      _
    $region3: #{tpu_custom_call.1} parent=1 // pred_check_branch
      %12 = sbr.rel (0) target = $region5
    $region4: #{tpu_custom_call.1} parent=1 // pred_region
      _
    $region5: #{tpu_custom_call.1} parent=1 // pred_fallthru
      _
    // Predicated region
    $region6: #{tpu_custom_call.1} parent=1 // pred_check
      _
    $region7: #{tpu_custom_call.1} parent=1 // pred_check_branch
      %14 = sbr.rel (0) target = $region9
    $region8: #{tpu_custom_call.1} parent=1 // pred_region
      %s16 = ssub.s32 512, 512
      %17 = vsyncadd [#allocation6], %s16
      %s18 = sshll.u32 [#allocation5], 4
      %s19 = int_to_ptr.vmem [resolvable:$true] %s18
      %24 = dma.hbm_to_vmem [thread:$0]  %s1, 512, %s19, [#allocation6], 128, 128, 8
    $region9: #{tpu_custom_call.1} parent=1 // pred_fallthru
      _
    // Predicated region
    $region10: #{tpu_custom_call.1} parent=1 // pred_check
      _
    $region11: #{tpu_custom_call.1} parent=1 // pred_check_branch
      %26 = sbr.rel (0) target = $region13
    $region12: #{tpu_custom_call.1} parent=1 // pred_region
      _
    $region13: #{tpu_custom_call.1} parent=1 // pred_fallthru
      _
    // Predicated region
    $region14: #{tpu_custom_call.1} parent=1 // pred_check
      _
    $region15: #{tpu_custom_call.1} parent=1 // pred_check_branch
      %28 = sbr.rel (0) target = $region17
    $region16: #{tpu_custom_call.1} parent=1 // pred_region
      _
    $region17: #{tpu_custom_call.1} parent=1 // pred_fallthru
      _
    // Predicated region
    $region18: #{tpu_custom_call.1} parent=1 // pred_check
      _
    $region19: #{tpu_custom_call.1} parent=1 // pred_check_branch
      %30 = sbr.rel (0) target = $region21
    $region20: #{tpu_custom_call.1} parent=1 // pred_region
      %31 = dma.done [#allocation6], 512
    $region21: #{tpu_custom_call.1} parent=1 // pred_fallthru
      _
    %p32 = scmp.eq.s32.totalorder 0, 0
    // Predicated region
    $region22: #{tpu_custom_call.1} parent=1 // pred_check
      %p33 = pneg %p32
    $region23: #{tpu_custom_call.1} parent=1 // pred_check_branch
      %35 = sbr.rel (%p33) target = $region25
    $region24: #{tpu_custom_call.1} parent=1 // pred_region
      %vm36 = vcmask 7168
      %37 = vst.msk [vmem:[#allocation2] sm:$0xff] %vm36, -inf
      %38 = vst.msk [vmem:[#allocation3] sm:$0xff] %vm36, 0.0
      %39 = vst.msk [vmem:[#allocation4] sm:$0xff] %vm36, 0.0
    $region25: #{tpu_custom_call.1} parent=1 // pred_fallthru
      _
    %v40 = vld [vmem:[%s0] sm:$0xff]
    %v41 = vld [vmem:[#allocation5] sm:$0xff]
    %v42 = vld [vmem:[#allocation5 + $0x8] sm:$0xff]
    %v43 = vld [vmem:[#allocation5 + $0x10] sm:$0xff]
    %v44 = vld [vmem:[#allocation5 + $0x18] sm:$0xff]
    %v45 = vld [vmem:[%s2] sm:$0xff]
    %v46 = vld [vmem:[%s3] sm:$0x3]
    %v47 = vmul.f32 %v45, 4.0
    %v48 = vsub.f32 1.0, %v45
    %v49 = vmul.f32 %v48, 2.0
    %v50 = vadd.f32 %v47, %v49
    %v51 = vrcp.pop %v50
    %v52 = vmul.f32 %v51, %v51
    %54 = vset.pattern.permute.xlu0 0
    %55 = vperm.xlu0 %54, %v45
    %v56 = vpop.permute.xlu0 %55
    %v58 = vlaneseq
    %v59 = vshrl.u32 %v58, 7
    %v60 = vsub.s32 0, %v59
    %v61 = vrot.slane %v46, %v60
    %v62 = vsub.f32 %v56, %v61
    %v63 = vmul.f32 %v62, %v62
    %65 = vset.pattern.permute.xlu0 1
    %66 = vperm.xlu0 %65, %v52
    %v67 = vpop.permute.xlu0 %66
    %v69 = vmul.f32 %v63, %v67
    %v70 = vsub.f32 0.0, %v69
    %v71 = vmul.f32 %v70, 1.442695
    %v72 = vpow.pop %v71
    %vm73 = vcmp.ge.f32.partialorder %v72, 0.1
    %74 = vset.pattern.permute.xlu0 1
    %75 = vperm.xlu0 %74, %v45
    %v76 = vpop.permute.xlu0 %75
    %v78 = vlaneseq
    %v79 = vshrl.u32 %v78, 7
    %v80 = vsub.s32 1, %v79
    %v81 = vrot.slane %v46, %v80
    %vm82 = vcmp.eq.f32.partialorder %v76, %v81
    %vm83 = vmand %vm73, %vm82
    %v84 = vsel %vm83, %v72, 0.0
    %vm85 = vcmask 261120
    %v87 = vsel %vm85, %v40, 0
    %89 = vmatprep.subr.mxu0 0.0
    %90 = vmatpush1.msra.mxu0 0.0
    %91 = vmatprep.subr.mxu0 0.0
    %92 = vmatpush1.msra.mxu0 0.0
    %93 = vmatprep.subr.mxu0 0.0
    %94 = vmatpush1.msra.mxu0 0.0
    %95 = vmatprep.subr.mxu0 0.0
    %96 = vmatpush1.msra.mxu0 0.0
    %97 = vmatprep.subr.mxu0 0.0
    %98 = vmatpush1.msra.mxu0 0.0
    %99 = vmatprep.subr.mxu0 0.0
    %100 = vmatpush1.msra.mxu0 0.0
    %101 = vmatprep.subr.mxu0 0.0
    %102 = vmatpush1.msra.mxu0 0.0
    %103 = vmatprep.subr.mxu0 0.0
    %104 = vmatpush1.msra.mxu0 0.0
    %105 = vmatprep.subr.mxu0 0.0
    %106 = vmatpush1.msra.mxu0 0.0
    %107 = vmatprep.subr.mxu0 0.0
    %108 = vmatpush1.msra.mxu0 0.0
    %109 = vmatprep.subr.mxu0 0.0
    %110 = vmatpush1.msra.mxu0 0.0
    %111 = vmatprep.subr.mxu0 0.0
    %112 = vmatpush1.msra.mxu0 0.0
    %113 = vmatprep.subr.mxu0 0.0
    %114 = vmatpush1.msra.mxu0 %v44
    %115 = vmatprep.subr.mxu0 0.0
    %116 = vmatpush1.msra.mxu0 %v43
    %117 = vmatprep.subr.mxu0 0.0
    %118 = vmatpush1.msra.mxu0 %v42
    %119 = vmatprep.subr.mxu0 0.0
    %120 = vmatpush1.msra.mxu0 %v41
    %121 = vmatprep.subr.mxu0 0.0
    %122 = vmatpush2.msra.mxu0 0.0
    %123 = vmatprep.subr.mxu0 0.0
    %124 = vmatpush2.msra.mxu0 0.0
    %125 = vmatprep.subr.mxu0 0.0
    %126 = vmatpush2.msra.mxu0 0.0
    %127 = vmatprep.subr.mxu0 0.0
    %128 = vmatpush2.msra.mxu0 0.0
    %129 = vmatprep.subr.mxu0 0.0
    %130 = vmatpush2.msra.mxu0 0.0
    %131 = vmatprep.subr.mxu0 0.0
    %132 = vmatpush2.msra.mxu0 0.0
    %133 = vmatprep.subr.mxu0 0.0
    %134 = vmatpush2.msra.mxu0 0.0
    %135 = vmatprep.subr.mxu0 0.0
    %136 = vmatpush2.msra.mxu0 0.0
    %137 = vmatprep.subr.mxu0 0.0
    %138 = vmatpush2.msra.mxu0 0.0
    %139 = vmatprep.subr.mxu0 0.0
    %140 = vmatpush2.msra.mxu0 0.0
    %141 = vmatprep.subr.mxu0 0.0
    %142 = vmatpush2.msra.mxu0 0.0
    %143 = vmatprep.subr.mxu0 0.0
    %144 = vmatpush2.msra.mxu0 0.0
    %145 = vmatprep.subr.mxu0 0.0
    %146 = vmatpush2.msra.mxu0 0.0
    %147 = vmatprep.subr.mxu0 0.0
    %148 = vmatpush2.msra.mxu0 0.0
    %149 = vmatprep.subr.mxu0 0.0
    %150 = vmatpush2.msra.mxu0 0.0
    %151 = vmatprep.subr.mxu0 0.0
    %152 = vmatpush2.msra.mxu0 0.0
    %153 = vmatprep.mubr.f32.mxu0 0.0
    %154 = vmatmul.mubr.f32.gmra.mxu0 %v87
    %v155 = vpop.f32.mrf.mxu0
    %v156 = vadd.f32 0.0, %v155
    %v157 = vpop.f32.mrf.mxu0
    %158 = vdwg.mxu0
    %v159 = vmul.f32 %v156, 2.0
    %s160 = smul.u32 0, 128
    %v161 = vlaneseq
    %v162 = vand.u32 %v161, 127
    %v163 = vstv %s160
    %v164 = vadd.s32 %v163, %v162
    %vm165 = vcmp.lt.s32.totalorder %v164, 8
    %v166 = vsel %vm165, 1, 0
    %vm167 = vcmp.eq.s32.totalorder %v166, 1
    %v168 = vsel %vm167, %v159, -inf
    %v169 = vld [vmem:[#allocation2] sm:$0xff]
    %170 = vmax.xlane.f32.xlu0 %v168
    %v171 = vpop.xlane.xlu0 %170
    %v172 = vmax.f32 %v169, %v171
    %v173 = vsub.f32 %v169, %v172
    %v174 = vmul.f32 %v173, 1.442695
    %v175 = vpow.pop %v174
    %177 = vset.pattern.permute.xlu0 0
    %178 = vperm.xlu0 %177, %v172
    %v179 = vpop.permute.xlu0 %178
    %v181 = vsub.f32 %v168, %v179
    %v182 = vmul.f32 %v181, 1.442695
    %v183 = vpow.pop %v182
    %v184 = vld [vmem:[#allocation3] sm:$0xff]
    %v185 = vmul.f32 %v175, %v184
    %186 = vadd.xlane.f32.xlu0 %v183
    %v187 = vpop.xlane.xlu0 %186
    %v188 = vadd.f32 %v185, %v187
    %vm189 = vcmask 7168
    %190 = vst.msk [vmem:[#allocation3] sm:$0xff] %vm189, %v188
    %v191 = vld [vmem:[#allocation4] sm:$0xff]
    %v192 = vmul.f32 %v175, %v191
    %v193 = vmul.f32 %v84, %v183
    %194 = vadd.xlane.f32.xlu0 %v193
    %v195 = vpop.xlane.xlu0 %194
    %v196 = vadd.f32 %v192, %v195
    %197 = vst.msk [vmem:[#allocation4] sm:$0xff] %vm189, %v196
    %198 = vst.msk [vmem:[#allocation2] sm:$0xff] %vm189, %v172
    // Predicated region
    $region26: #{tpu_custom_call.1} parent=1 // pred_check
      %p199 = pneg %p32
    $region27: #{tpu_custom_call.1} parent=1 // pred_check_branch
      %201 = sbr.rel (%p199) target = $region29
    $region28: #{tpu_custom_call.1} parent=1 // pred_region
      %v202 = vld [vmem:[#allocation3] sm:$0xff]
      %v203 = vrcp.pop %v202
      %v204 = vld [vmem:[#allocation4] sm:$0xff]
      %v205 = vmul.f32 %v204, %v203
      %v206 = vmax.f32 %v205, 1e-10
      %v207 = vlog2.pop %v206
      %v208 = vmul.f32 %v207, 0.6931472
      %v209 = vsub.f32 0.0, %v208
      %211 = vset.pattern.permute.xlu0 0
      %212 = vperm.xlu0 %211, %v209
      %v213 = vpop.permute.xlu0 %212
      %215 = vst [vmem:[#allocation8] sm:$0xff] %v213
    $region29: #{tpu_custom_call.1} parent=1 // pred_fallthru
      _
    // Predicated region
    $region30: #{tpu_custom_call.1} parent=1 // pred_check
      _
    $region31: #{tpu_custom_call.1} parent=1 // pred_check_branch
      %217 = sbr.rel (0) target = $region33
    $region32: #{tpu_custom_call.1} parent=1 // pred_region
      %s219 = ssub.s32 128, 128
      %220 = vsyncadd [#allocation7], %s219
      %s222 = sshll.u32 [#allocation8], 4
      %s223 = int_to_ptr.vmem [resolvable:$true] %s222
      %225 = dma.vmem_to_hbm [thread:$0]  %s223, 128, %s4, [#allocation7]
    $region33: #{tpu_custom_call.1} parent=1 // pred_fallthru
      _
    // Predicated region
    $region34: #{tpu_custom_call.1} parent=1 // pred_check
      _
    $region35: #{tpu_custom_call.1} parent=1 // pred_check_branch
      %227 = sbr.rel (0) target = $region37
    $region36: #{tpu_custom_call.1} parent=1 // pred_region
      %228 = dma.done [#allocation7], 128
    $region37: #{tpu_custom_call.1} parent=1 // pred_fallthru
      _
    %229 = vsyncpa [#allocation6], 1
    %230 = vsyncpa [#allocation7], 1

</llo_original>
